<compile_context>
chip_gen: v7x
topology: tpu7x:2x2x1
jax: 0.10.0
libtpu: 0.0.40
codegen_flags: <defaults>
</compile_context>

<pallas_src>
import jax
import jax.numpy as jnp
from jax.experimental import pallas as pl
from jax.experimental.pallas import tpu as pltpu


def circle_classifier_kernel(params_ref, x_ref, o_ref):
    # params_ref: (15,) f32 in SMEM  -- [w2(0:5) | w1(5:10) | b1_eff(10:15)]
    # x_ref:      (5, T) f32 in VMEM -- features on sublanes, batch on lanes
    # o_ref:      (5, T) f32 in VMEM
    # layer2 (bias folded into b1_eff): h = sum_k w2[k] * x[k, :]   -> (1, T)
    h = params_ref[0] * x_ref[0:1, :]
    for k in range(1, 5):
        h = h + params_ref[k] * x_ref[k:k + 1, :]
    # layer1: out[j, :] = w1[j] * h + b1_eff[j]                      -> (5, T)
    for j in range(5):
        o_ref[j:j + 1, :] = params_ref[5 + j] * h + params_ref[10 + j]


def _round_up(x, m):
    return ((x + m - 1) // m) * m


def circle_classifier_forward_fm(x_fm, w1, b1, w2, b2, *, max_tile_n=65536):
    """Feature-major forward: x_fm (5, N) f32 -> (5, N) f32. Zero wrapper copies."""
    f, n = x_fm.shape
    assert f == 5

    # Pack 15 parameter scalars; fold layer2's bias into layer1's bias.
    w2_row = w2.reshape(5).astype(jnp.float32)
    w1_col = w1.reshape(5).astype(jnp.float32)
    b1_eff = (b1.reshape(5) + w1.reshape(5) * b2.reshape(())).astype(jnp.float32)
    params = jnp.concatenate([w2_row, w1_col, b1_eff])          # (15,) -> SMEM

    # 128-aligned batch tile: big enough to amortize per-grid-step overhead,
    # capped so (a) the grid keeps >= 2 steps (v7x has 2 TensorCores) and
    # (b) the double-buffered VMEM footprint stays well under 32 MiB.
    tile_n = max(128, min(max_tile_n, _round_up(pl.cdiv(n, 2), 128)))
    grid = (pl.cdiv(n, tile_n),)   # partial last block padded/masked by Pallas

    return pl.pallas_call(
        circle_classifier_kernel,
        out_shape=jax.ShapeDtypeStruct((5, n), jnp.float32),
        grid_spec=pltpu.PrefetchScalarGridSpec(
            num_scalar_prefetch=1,
            grid=grid,
            in_specs=[pl.BlockSpec((5, tile_n), lambda i, params: (0, i))],
            out_specs=pl.BlockSpec((5, tile_n), lambda i, params: (0, i)),
        ),
        compiler_params=pltpu.CompilerParams(
            dimension_semantics=("parallel",),
            vmem_limit_bytes=32 * 1024 * 1024,
        ),
    )(params, x_fm.astype(jnp.float32))


def circle_classifier_forward(x, w1, b1, w2, b2, *, max_tile_n=65536):
    """x: (N, 5) float32 -> (N, 5) float32, matching the PyTorch module layout.

    The two transposes below are pure layout plumbing: if the surrounding model
    can keep activations feature-major, call circle_classifier_forward_fm
    directly and avoid both extra HBM round-trips.
    """
    out_fm = circle_classifier_forward_fm(
        x.astype(jnp.float32).T, w1, b1, w2, b2, max_tile_n=max_tile_n)
    return out_fm.T


def reference_forward(x, w1, b1, w2, b2):
    h = x @ w2.T + b2          # layer2: (N, 5) -> (N, 1)
    return h @ w1.T + b1       # layer1: (N, 1) -> (N, 5)


if __name__ == "__main__":
    key = jax.random.PRNGKey(0)
    kx, k1w, k1b, k2w, k2b = jax.random.split(key, 5)

    # 300 is deliberately not a multiple of 128: exercises the 2-step parallel
    # grid and the masked partial last block.
    batch = 300
    x = jax.random.normal(kx, (batch, 5), dtype=jnp.float32)

    # Deterministic parameter init (uniform, PyTorch-Linear-like bounds).
    w1 = jax.random.uniform(k1w, (5, 1), jnp.float32, -1.0, 1.0)                  # layer1.weight
    b1 = jax.random.uniform(k1b, (5,), jnp.float32, -1.0, 1.0)                    # layer1.bias
    w2 = jax.random.uniform(k2w, (1, 5), jnp.float32, -(5 ** -0.5), 5 ** -0.5)    # layer2.weight
    b2 = jax.random.uniform(k2b, (1,), jnp.float32, -(5 ** -0.5), 5 ** -0.5)      # layer2.bias

    out = circle_classifier_forward(x, w1, b1, w2, b2)
    out = jax.block_until_ready(out)

    ref = reference_forward(x, w1, b1, w2, b2)
    assert out.shape == (batch, 5)
    assert jnp.allclose(out, ref, atol=1e-5, rtol=1e-5), float(jnp.max(jnp.abs(out - ref)))

    print("KERNEL_OK")
</pallas_src>

<mosaic_0001>
module attributes {stable_mosaic.version = 11 : i64} {
  func.func @circle_classifier_kernel(%arg0: i32, %arg1: memref<15xf32, #tpu.memory_space<smem>>, %arg2: memref<5x256xf32, #tpu.memory_space<vmem>>, %arg3: memref<5x256xf32, #tpu.memory_space<vmem>>) attributes {dimension_semantics = [#tpu.dimension_semantics<parallel>], iteration_bounds = array<i64: 2>, scalar_prefetch = 1 : i64, scratch_operands = 0 : i64, tpu.core_type = #tpu.core_type<tc>, window_params = [{transform_indices = @transform_0, window_bounds = array<i64: 5, 256>}, {transform_indices = @transform_1, window_bounds = array<i64: 5, 256>}]} {
    %c0 = arith.constant 0 : index
    %0 = memref.load %arg1[%c0] : memref<15xf32, #tpu.memory_space<smem>>
    %c0_0 = arith.constant 0 : index
    %c0_1 = arith.constant 0 : index
    %1 = vector.load %arg2[%c0_0, %c0_1] : memref<5x256xf32, #tpu.memory_space<vmem>>, vector<1x256xf32>
    %2 = vector.broadcast %0 : f32 to vector<1x256xf32>
    %3 = arith.mulf %2, %1 : vector<1x256xf32>
    %c1 = arith.constant 1 : index
    %4 = memref.load %arg1[%c1] : memref<15xf32, #tpu.memory_space<smem>>
    %c1_2 = arith.constant 1 : index
    %c0_3 = arith.constant 0 : index
    %5 = vector.load %arg2[%c1_2, %c0_3] : memref<5x256xf32, #tpu.memory_space<vmem>>, vector<1x256xf32>
    %6 = vector.broadcast %4 : f32 to vector<1x256xf32>
    %7 = arith.mulf %6, %5 : vector<1x256xf32>
    %8 = arith.addf %3, %7 : vector<1x256xf32>
    %c2 = arith.constant 2 : index
    %9 = memref.load %arg1[%c2] : memref<15xf32, #tpu.memory_space<smem>>
    %c2_4 = arith.constant 2 : index
    %c0_5 = arith.constant 0 : index
    %10 = vector.load %arg2[%c2_4, %c0_5] : memref<5x256xf32, #tpu.memory_space<vmem>>, vector<1x256xf32>
    %11 = vector.broadcast %9 : f32 to vector<1x256xf32>
    %12 = arith.mulf %11, %10 : vector<1x256xf32>
    %13 = arith.addf %8, %12 : vector<1x256xf32>
    %c3 = arith.constant 3 : index
    %14 = memref.load %arg1[%c3] : memref<15xf32, #tpu.memory_space<smem>>
    %c3_6 = arith.constant 3 : index
    %c0_7 = arith.constant 0 : index
    %15 = vector.load %arg2[%c3_6, %c0_7] : memref<5x256xf32, #tpu.memory_space<vmem>>, vector<1x256xf32>
    %16 = vector.broadcast %14 : f32 to vector<1x256xf32>
    %17 = arith.mulf %16, %15 : vector<1x256xf32>
    %18 = arith.addf %13, %17 : vector<1x256xf32>
    %c4 = arith.constant 4 : index
    %19 = memref.load %arg1[%c4] : memref<15xf32, #tpu.memory_space<smem>>
    %c4_8 = arith.constant 4 : index
    %c0_9 = arith.constant 0 : index
    %20 = vector.load %arg2[%c4_8, %c0_9] : memref<5x256xf32, #tpu.memory_space<vmem>>, vector<1x256xf32>
    %21 = vector.broadcast %19 : f32 to vector<1x256xf32>
    %22 = arith.mulf %21, %20 : vector<1x256xf32>
    %23 = arith.addf %18, %22 : vector<1x256xf32>
    %c5 = arith.constant 5 : index
    %24 = memref.load %arg1[%c5] : memref<15xf32, #tpu.memory_space<smem>>
    %25 = vector.broadcast %24 : f32 to vector<1x256xf32>
    %26 = arith.mulf %25, %23 : vector<1x256xf32>
    %c10 = arith.constant 10 : index
    %27 = memref.load %arg1[%c10] : memref<15xf32, #tpu.memory_space<smem>>
    %28 = vector.broadcast %27 : f32 to vector<1x256xf32>
    %29 = arith.addf %26, %28 : vector<1x256xf32>
    %c0_10 = arith.constant 0 : index
    %c0_11 = arith.constant 0 : index
    %30 = vector.load %arg3[%c0_10, %c0_11] : memref<5x256xf32, #tpu.memory_space<vmem>>, vector<1x256xf32>
    tpu.vector_store %arg3[%c0_10, %c0_11], %29 {strides = array<i32>} : memref<5x256xf32, #tpu.memory_space<vmem>>, vector<1x256xf32>,
    %c6 = arith.constant 6 : index
    %31 = memref.load %arg1[%c6] : memref<15xf32, #tpu.memory_space<smem>>
    %32 = vector.broadcast %31 : f32 to vector<1x256xf32>
    %33 = arith.mulf %32, %23 : vector<1x256xf32>
    %c11 = arith.constant 11 : index
    %34 = memref.load %arg1[%c11] : memref<15xf32, #tpu.memory_space<smem>>
    %35 = vector.broadcast %34 : f32 to vector<1x256xf32>
    %36 = arith.addf %33, %35 : vector<1x256xf32>
    %c1_12 = arith.constant 1 : index
    %c0_13 = arith.constant 0 : index
    %37 = vector.load %arg3[%c1_12, %c0_13] : memref<5x256xf32, #tpu.memory_space<vmem>>, vector<1x256xf32>
    tpu.vector_store %arg3[%c1_12, %c0_13], %36 {strides = array<i32>} : memref<5x256xf32, #tpu.memory_space<vmem>>, vector<1x256xf32>,
    %c7 = arith.constant 7 : index
    %38 = memref.load %arg1[%c7] : memref<15xf32, #tpu.memory_space<smem>>
    %39 = vector.broadcast %38 : f32 to vector<1x256xf32>
    %40 = arith.mulf %39, %23 : vector<1x256xf32>
    %c12 = arith.constant 12 : index
    %41 = memref.load %arg1[%c12] : memref<15xf32, #tpu.memory_space<smem>>
    %42 = vector.broadcast %41 : f32 to vector<1x256xf32>
    %43 = arith.addf %40, %42 : vector<1x256xf32>
    %c2_14 = arith.constant 2 : index
    %c0_15 = arith.constant 0 : index
    %44 = vector.load %arg3[%c2_14, %c0_15] : memref<5x256xf32, #tpu.memory_space<vmem>>, vector<1x256xf32>
    tpu.vector_store %arg3[%c2_14, %c0_15], %43 {strides = array<i32>} : memref<5x256xf32, #tpu.memory_space<vmem>>, vector<1x256xf32>,
    %c8 = arith.constant 8 : index
    %45 = memref.load %arg1[%c8] : memref<15xf32, #tpu.memory_space<smem>>
    %46 = vector.broadcast %45 : f32 to vector<1x256xf32>
    %47 = arith.mulf %46, %23 : vector<1x256xf32>
    %c13 = arith.constant 13 : index
    %48 = memref.load %arg1[%c13] : memref<15xf32, #tpu.memory_space<smem>>
    %49 = vector.broadcast %48 : f32 to vector<1x256xf32>
    %50 = arith.addf %47, %49 : vector<1x256xf32>
    %c3_16 = arith.constant 3 : index
    %c0_17 = arith.constant 0 : index
    %51 = vector.load %arg3[%c3_16, %c0_17] : memref<5x256xf32, #tpu.memory_space<vmem>>, vector<1x256xf32>
    tpu.vector_store %arg3[%c3_16, %c0_17], %50 {strides = array<i32>} : memref<5x256xf32, #tpu.memory_space<vmem>>, vector<1x256xf32>,
    %c9 = arith.constant 9 : index
    %52 = memref.load %arg1[%c9] : memref<15xf32, #tpu.memory_space<smem>>
    %53 = vector.broadcast %52 : f32 to vector<1x256xf32>
    %54 = arith.mulf %53, %23 : vector<1x256xf32>
    %c14 = arith.constant 14 : index
    %55 = memref.load %arg1[%c14] : memref<15xf32, #tpu.memory_space<smem>>
    %56 = vector.broadcast %55 : f32 to vector<1x256xf32>
    %57 = arith.addf %54, %56 : vector<1x256xf32>
    %c4_18 = arith.constant 4 : index
    %c0_19 = arith.constant 0 : index
    %58 = vector.load %arg3[%c4_18, %c0_19] : memref<5x256xf32, #tpu.memory_space<vmem>>, vector<1x256xf32>
    tpu.vector_store %arg3[%c4_18, %c0_19], %57 {strides = array<i32>} : memref<5x256xf32, #tpu.memory_space<vmem>>, vector<1x256xf32>,
    return
  }
  func.func @transform_0(%arg0: i32, %arg1: memref<15xf32, #tpu.memory_space<smem>>) -> (i32, i32) {
    %c0_i32 = arith.constant 0 : i32
    %c0_i32_0 = arith.constant 0 : i32
    return %c0_i32, %arg0 : i32, i32
  }
  func.func @transform_1(%arg0: i32, %arg1: memref<15xf32, #tpu.memory_space<smem>>) -> (i32, i32) {
    %c0_i32 = arith.constant 0 : i32
    %c0_i32_0 = arith.constant 0 : i32
    return %c0_i32, %arg0 : i32, i32
  }
}

</mosaic_0001>

<llo_original>
// kernel: tpu_custom_call.1
$region0: #{tpu_custom_call.1}
  #allocation0 [shape = 'u32[]', space=smem, size = 0x4, offset = 0x4, fixed_abs, tag = 'smem constant byte address 0x4 - core index']
  #allocation1 [shape = 'u32[144,128]{1,0:T(1,128)}', space=vmem, size = 0x12000, scoped, tag = 'internal scratch']
  #allocation2 [shape = 's32[1]{0}', space=sflag, size = 0x4, scoped, tag = 'scoped memory for tpu_custom_call.1']
  #allocation3 [shape = 'u8[512]{0}', space=smem, size = 0x200, scoped, tag = 'prefetched SMEM operand 0']
  %s0 = inlined_call_operand.hbm [shape: f32[15], index: 0, kind: input, shape index: {}]
  %s1 = inlined_call_operand.hbm [shape: f32[5,300], index: 1, kind: input, shape index: {}]
  %s2 = inlined_call_operand.hbm [shape: f32[5,300], index: 2, kind: output, shape index: {}]
  %s3 = sld [smem:[#allocation0]]
  $region41: #{tpu_custom_call.1} parent=0
    _
  %s5 = ssub.s32 1, %s3
  %s6 = scalar_select 0, %s5, %s3
  %8 = dma.hbm_to_smem %s0, 16, [#allocation3], [#allocation2]
  %9 = dma.done [#allocation2], 16
  %10 = sfence
  $region1: #{tpu_custom_call.1} parent=0
    #allocation4 [shape = 'u8[16384]{0}', space=vmem, size = 0x4000, scoped, tag = 'input window, operand 1']
    #allocation5 [shape = 's32[2]{0}', space=sflag, size = 0x8, scoped, tag = 'scoped memory for tpu_custom_call.1']
    #allocation6 [shape = 's32[2]{0}', space=sflag, size = 0x8, scoped, tag = 'scoped memory for tpu_custom_call.1']
    #allocation7 [shape = 'u8[16384]{0}', space=vmem, size = 0x4000, scoped, tag = 'output window, operand 0']
    %11 = vsyncpa [#allocation5], 0
    %s12 = scalar_lea.sflag [#allocation5], 1
    %13 = vsyncpa %s12, 0
    %14 = vsyncpa [#allocation6], 0
    %s15 = scalar_lea.sflag [#allocation6], 1
    %16 = vsyncpa %s15, 0
    loop: start=0, step=1, limit=4
    $region2: #{tpu_custom_call.1} parent=1 // loop_pre_header
      _
    $region3: #{tpu_custom_call.1} parent=1 // loop_header
      %s18 = sphi 0, %s22
      %p19 = scmp.ge.s32.totalorder %s18, 4
      %s28 = sphi 0, %s30
      %s31 = sphi 0, %s28
      %s32 = sphi 0, %s31
      %s48 = sphi 0, %s32
      %s54 = sphi 0, %s56
      %s57 = sphi 0, %s54
      %s58 = sphi 0, %s57
      %s74 = sphi 0, %s58
    $region4: #{tpu_custom_call.1} parent=1 // loop_header_branch
      %21 = sbr.rel (%p19) target = $region8
    $region5: #{tpu_custom_call.1} parent=1 // loop_body
      %s23 = ssub.s32 %s18, 1
      %s24 = ssub.s32 %s18, 2
      %s25 = sadd.s32 %s18, 1
      %s26 = ssub.s32 %s18, %s25
      %p27 = scmp.eq.s32.totalorder %s26, 0
      %s29 = sadd.s32 %s28, 1
      %s30 = scalar_select %p27, %s28, %s29
      %p33 = pneg %p27
      %p34 = scmp.eq.s32.totalorder %s18, 1
      %p35 = por %p33, %p34
      %p36 = scmp.ne.s32.totalorder %s28, %s31
      %p37 = scmp.eq.s32.totalorder %s18, 0
      %p38 = por %p36, %p37
      %p39 = scmp.ne.s32.totalorder %s28, %s31
      %p40 = scmp.eq.s32.totalorder %s23, 1
      %p41 = por %p39, %p40
      %p42 = scmp.ne.s32.totalorder %s31, %s32
      %p43 = scmp.eq.s32.totalorder %s23, 0
      %p44 = por %p42, %p43
      %p45 = scmp.ne.s32.totalorder %s31, %s32
      %p46 = scmp.eq.s32.totalorder %s24, 1
      %p47 = por %p45, %p46
      %p49 = scmp.ne.s32.totalorder %s32, %s48
      %p50 = scmp.eq.s32.totalorder %s24, 0
      %p51 = por %p49, %p50
      %s52 = ssub.s32 %s18, %s25
      %p53 = scmp.eq.s32.totalorder %s52, 0
      %s55 = sadd.s32 %s54, 1
      %s56 = scalar_select %p53, %s54, %s55
      %p59 = pneg %p53
      %p60 = scmp.eq.s32.totalorder %s18, 1
      %p61 = por %p59, %p60
      %p62 = scmp.ne.s32.totalorder %s54, %s57
      %p63 = scmp.eq.s32.totalorder %s18, 0
      %p64 = por %p62, %p63
      %p65 = scmp.ne.s32.totalorder %s54, %s57
      %p66 = scmp.eq.s32.totalorder %s23, 1
      %p67 = por %p65, %p66
      %p68 = scmp.ne.s32.totalorder %s57, %s58
      %p69 = scmp.eq.s32.totalorder %s23, 0
      %p70 = por %p68, %p69
      %p71 = scmp.ne.s32.totalorder %s57, %s58
      %p72 = scmp.eq.s32.totalorder %s24, 1
      %p73 = por %p71, %p72
      %p75 = scmp.ne.s32.totalorder %s58, %s74
      %p76 = scmp.eq.s32.totalorder %s24, 0
      %p77 = por %p75, %p76
      %p78 = scmp.le.s32.totalorder 1, %s18
      %p79 = scmp.lt.s32.totalorder %s18, 3
      %p80 = pnand %p78, %p79
      %p81 = pneg %p80
      // Predicated region
      $region9: #{tpu_custom_call.1} parent=5 // pred_check
        _
      $region10: #{tpu_custom_call.1} parent=5 // pred_check_branch
        %83 = sbr.rel (%p80) target = $region12
      $region11: #{tpu_custom_call.1} parent=5 // pred_region
        %s84 = ssub.s32 %s18, 1
      $region12: #{tpu_custom_call.1} parent=5 // pred_fallthru
        _
      %p85 = scmp.lt.s32.totalorder %s18, 2
      // Predicated region
      $region13: #{tpu_custom_call.1} parent=5 // pred_check
        %p86 = pneg %p85
      $region14: #{tpu_custom_call.1} parent=5 // pred_check_branch
        %88 = sbr.rel (%p86) target = $region16
      $region15: #{tpu_custom_call.1} parent=5 // pred_region
        // Predicated region
        $region17: #{tpu_custom_call.1} parent=15 // pred_check
          %p89 = pneg %p38
        $region18: #{tpu_custom_call.1} parent=15 // pred_check_branch
          %91 = sbr.rel (%p89) target = $region20
        $region19: #{tpu_custom_call.1} parent=15 // pred_region
          %s92 = sand.u32 %s28, 1
          %s93 = scalar_lea.sflag [#allocation5], %s92
          %s94 = sand.u32 %s28, 1
          %s95 = smul.addr %s94, 16
          %s96 = scalar_lea.vmem [#allocation4], %s95
          %s97 = smul.u32 2, %s18
          %s98 = ssub.s32 3, %s97
          %p99 = scmp.lt.s32.totalorder %s98, 2
          %s100 = scalar_select %p99, %s98, 2
          %s101 = smul.u32 128, %s100
          %s103 = ssub.s32 256, %s101
          %104 = vsyncadd %s93, %s103
          %p105 = scmp.ne.s32.totalorder 0, %s101
          %s106 = smul.addr %s97, 128
          %s107 = scalar_lea.hbm %s1, %s106
          %s108 = smul.u32 %s100, 8
          %s109 = sshll.u32 %s108, 4
          %s110 = sshll.u32 %s96, 4
          %s111 = int_to_ptr.vmem [resolvable:$true] %s110
          %113 = dma.hbm_to_vmem [thread:$0]  (%p105), %s107, %s109, %s111, %s93
        $region20: #{tpu_custom_call.1} parent=15 // pred_fallthru
          _
      $region16: #{tpu_custom_call.1} parent=5 // pred_fallthru
        _
      %p114 = scmp.le.s32.totalorder 1, %s18
      %p115 = scmp.lt.s32.totalorder %s18, 3
      %p116 = pnand %p114, %p115
      %p117 = pneg %p116
      // Predicated region
      $region21: #{tpu_custom_call.1} parent=5 // pred_check
        _
      $region22: #{tpu_custom_call.1} parent=5 // pred_check_branch
        %119 = sbr.rel (%p116) target = $region24
      $region23: #{tpu_custom_call.1} parent=5 // pred_region
        %s120 = ssub.s32 %s18, 1
        %s121 = sand.u32 %s31, 1
        %s122 = scalar_lea.sflag [#allocation5], %s121
        %s123 = sand.u32 %s31, 1
        %s124 = smul.addr %s123, 16
        %s125 = scalar_lea.vmem [#allocation4], %s124
        // Predicated region
        $region25: #{tpu_custom_call.1} parent=23 // pred_check
          %p126 = pneg %p44
        $region26: #{tpu_custom_call.1} parent=23 // pred_check_branch
          %128 = sbr.rel (%p126) target = $region28
        $region27: #{tpu_custom_call.1} parent=23 // pred_region
          %129 = dma.done %s122, 256
        $region28: #{tpu_custom_call.1} parent=23 // pred_fallthru
          _
        %s130 = sand.u32 %s31, 1
        %s131 = scalar_lea.sflag [#allocation5], %s130
        %s132 = sand.u32 %s31, 1
        %s133 = smul.addr %s132, 16
        %s134 = scalar_lea.vmem [#allocation4], %s133
        %p135 = pneg %p44
        %p136 = pneg %p41
        %p137 = pneg %p70
        %p138 = pneg %p67
        %s139 = sand.u32 %s57, 1
        %s140 = scalar_lea.sflag [#allocation6], %s139
        %s141 = sand.u32 %s57, 1
        %s142 = smul.addr %s141, 16
        %s143 = scalar_lea.vmem [#allocation7], %s142
        %s144 = smul.u32 2, %s23
        %s145 = ssub.s32 3, %s144
        %p146 = scmp.lt.s32.totalorder %s145, 2
        %s147 = scalar_select %p146, %s145, 2
        %s148 = smul.u32 128, %s147
        %s149 = smul.u32 2, %s23
        %s150 = ssub.s32 3, %s149
        %p151 = scmp.lt.s32.totalorder %s150, 2
        %s152 = scalar_select %p151, %s150, 2
        %s153 = smul.u32 128, %s152
        %s154 = sld [smem:[#allocation3]]
        %v155 = vld [vmem:[%s125] ss:$8 sm:$0x3]
        %v156 = vstv %s154
        %v157 = vmul.f32 %v156, %v155
        %s158 = sld [smem:[#allocation3 + $0x1]]
        %s159 = scalar_lea.vmem %s125, 1 [#allocation4]
        %v160 = vld [vmem:[%s159] ss:$8 sm:$0x3]
        %v161 = vstv %s158
        %v162 = vmul.f32 %v161, %v160
        %v163 = vadd.f32 %v157, %v162
        %s164 = sld [smem:[#allocation3 + $0x2]]
        %s165 = scalar_lea.vmem %s125, 2 [#allocation4]
        %v166 = vld [vmem:[%s165] ss:$8 sm:$0x3]
        %v167 = vstv %s164
        %v168 = vmul.f32 %v167, %v166
        %v169 = vadd.f32 %v163, %v168
        %s170 = sld [smem:[#allocation3 + $0x3]]
        %s171 = scalar_lea.vmem %s125, 3 [#allocation4]
        %v172 = vld [vmem:[%s171] ss:$8 sm:$0x3]
        %v173 = vstv %s170
        %v174 = vmul.f32 %v173, %v172
        %v175 = vadd.f32 %v169, %v174
        %s176 = sld [smem:[#allocation3 + $0x4]]
        %s177 = scalar_lea.vmem %s125, 4 [#allocation4]
        %v178 = vld [vmem:[%s177] ss:$8 sm:$0x3]
        %v179 = vstv %s176
        %v180 = vmul.f32 %v179, %v178
        %v181 = vadd.f32 %v175, %v180
        %s182 = sld [smem:[#allocation3 + $0x5]]
        %v183 = vstv %s182
        %v184 = vmul.f32 %v183, %v181
        %s185 = sld [smem:[#allocation3 + $0xa]]
        %v186 = vstv %s185
        %v187 = vadd.f32 %v184, %v186
        %v188 = vlaneseq
        %vm189 = vcmp.ge.s32.totalorder %v188, 0
        %vm190 = vcmp.lt.s32.totalorder %v188, 256
        %vm191 = vmand %vm189, %vm190
        %192 = vst.msk [vmem:[%s143] ss:$8 sm:$0x3] %vm191, %v187
        %193 = vst.msk [vmem:[%s143] ss:$8 sm:$0x0] %vm191, %v187
        %s194 = sld [smem:[#allocation3 + $0x6]]
        %v195 = vstv %s194
        %v196 = vmul.f32 %v195, %v181
        %s197 = sld [smem:[#allocation3 + $0xb]]
        %v198 = vstv %s197
        %v199 = vadd.f32 %v196, %v198
        %s200 = scalar_lea.vmem %s143, 1 [#allocation7]
        %201 = vst.msk [vmem:[%s200] ss:$8 sm:$0x3] %vm191, %v199
        %202 = vst.msk [vmem:[%s200] ss:$8 sm:$0x0] %vm191, %v199
        %s203 = sld [smem:[#allocation3 + $0x7]]
        %v204 = vstv %s203
        %v205 = vmul.f32 %v204, %v181
        %s206 = sld [smem:[#allocation3 + $0xc]]
        %v207 = vstv %s206
        %v208 = vadd.f32 %v205, %v207
        %s209 = scalar_lea.vmem %s143, 2 [#allocation7]
        %210 = vst.msk [vmem:[%s209] ss:$8 sm:$0x3] %vm191, %v208
        %211 = vst.msk [vmem:[%s209] ss:$8 sm:$0x0] %vm191, %v208
        %s212 = sld [smem:[#allocation3 + $0x8]]
        %v213 = vstv %s212
        %v214 = vmul.f32 %v213, %v181
        %s215 = sld [smem:[#allocation3 + $0xd]]
        %v216 = vstv %s215
        %v217 = vadd.f32 %v214, %v216
        %s218 = scalar_lea.vmem %s143, 3 [#allocation7]
        %219 = vst.msk [vmem:[%s218] ss:$8 sm:$0x3] %vm191, %v217
        %220 = vst.msk [vmem:[%s218] ss:$8 sm:$0x0] %vm191, %v217
        %s221 = sld [smem:[#allocation3 + $0x9]]
        %v222 = vstv %s221
        %v223 = vmul.f32 %v222, %v181
        %s224 = sld [smem:[#allocation3 + $0xe]]
        %v225 = vstv %s224
        %v226 = vadd.f32 %v223, %v225
        %s227 = scalar_lea.vmem %s143, 4 [#allocation7]
        %228 = vst.msk [vmem:[%s227] ss:$8 sm:$0x3] %vm191, %v226
        %229 = vst.msk [vmem:[%s227] ss:$8 sm:$0x0] %vm191, %v226
        %s230 = sand.u32 %s57, 1
        %s231 = scalar_lea.sflag [#allocation6], %s230
        %s232 = sand.u32 %s57, 1
        %s233 = smul.addr %s232, 16
        %s234 = scalar_lea.vmem [#allocation7], %s233
        // Predicated region
        $region29: #{tpu_custom_call.1} parent=23 // pred_check
          %p235 = pneg %p67
        $region30: #{tpu_custom_call.1} parent=23 // pred_check_branch
          %237 = sbr.rel (%p235) target = $region32
        $region31: #{tpu_custom_call.1} parent=23 // pred_region
          %s238 = smul.u32 2, %s23
          %s239 = ssub.s32 3, %s238
          %p240 = scmp.lt.s32.totalorder %s239, 2
          %s241 = scalar_select %p240, %s239, 2
          %s242 = smul.u32 128, %s241
          %s244 = ssub.s32 256, %s242
          %245 = vsyncadd %s231, %s244
          %p246 = scmp.ne.s32.totalorder 0, %s242
          %s247 = smul.addr %s238, 128
          %s248 = scalar_lea.hbm %s2, %s247
          %s249 = smul.u32 %s241, 8
          %s250 = sshll.u32 %s249, 4
          %s251 = sshll.u32 %s234, 4
          %s252 = int_to_ptr.vmem [resolvable:$true] %s251
          %254 = dma.vmem_to_hbm [thread:$0]  (%p246), %s252, %s250, %s248, %s231
        $region32: #{tpu_custom_call.1} parent=23 // pred_fallthru
          _
      $region24: #{tpu_custom_call.1} parent=5 // pred_fallthru
        _
      %p255 = scmp.le.s32.totalorder 2, %s18
      // Predicated region
      $region33: #{tpu_custom_call.1} parent=5 // pred_check
        %p256 = pneg %p255
      $region34: #{tpu_custom_call.1} parent=5 // pred_check_branch
        %258 = sbr.rel (%p256) target = $region36
      $region35: #{tpu_custom_call.1} parent=5 // pred_region
        %s259 = ssub.s32 %s18, 2
        // Predicated region
        $region37: #{tpu_custom_call.1} parent=35 // pred_check
          %p260 = pneg %p73
        $region38: #{tpu_custom_call.1} parent=35 // pred_check_branch
          %262 = sbr.rel (%p260) target = $region40
        $region39: #{tpu_custom_call.1} parent=35 // pred_region
          %s263 = sand.u32 %s58, 1
          %s264 = scalar_lea.sflag [#allocation6], %s263
          %s265 = sand.u32 %s58, 1
          %s266 = smul.addr %s265, 16
          %s267 = scalar_lea.vmem [#allocation7], %s266
          %268 = dma.done %s264, 256
        $region40: #{tpu_custom_call.1} parent=35 // pred_fallthru
          _
      $region36: #{tpu_custom_call.1} parent=5 // pred_fallthru
        _
    $region6: #{tpu_custom_call.1} parent=1 // loop_footer
      %s22 = sadd.s32 1, %s18
    $region7: #{tpu_custom_call.1} parent=1 // loop_footer_branch
      %17 = sbr.rel target = $region3
    $region8: #{tpu_custom_call.1} parent=1 // loop_exit
      _
    %269 = vsyncpa [#allocation5], 1
    %s270 = scalar_lea.sflag [#allocation5], 1
    %271 = vsyncpa %s270, 1
    %272 = vsyncpa [#allocation6], 1
    %s273 = scalar_lea.sflag [#allocation6], 1
    %274 = vsyncpa %s273, 1

</llo_original>
